<compile_context>
chip_gen: v7x
topology: tpu7x:2x2x1
jax: 0.10.0
libtpu: 0.0.40
codegen_flags: <defaults>
</compile_context>

<pallas_src>
import math

import jax
import jax.numpy as jnp
from jax.experimental import pallas as pl
from jax.experimental.pallas import tpu as pltpu

_LANE = 128
_SUBLANE = 8
_PALLAS_MIN_BATCH = 256  # below this the jnp path (fused into consumer) wins


# ----------------------------------------------------------------------------
# 1) Noise-level positional encoding
# ----------------------------------------------------------------------------
def _pos_enc_kernel(noise_ref, out_ref):
    # noise_ref: [TB, 1]   (VMEM, lane-padded to 128 in HBM/VMEM - accepted)
    # out_ref  : [TB, dim] (VMEM), dim = 2*count, count % 128 == 0 guaranteed
    count = out_ref.shape[-1] // 2

    # f32 compute regardless of input/output dtype.
    noise = noise_ref[...].astype(jnp.float32)                       # [TB, 1]

    # Frequency table built in-kernel (iota -> exp on EUP). Recomputed per grid
    # step on purpose: a program_id==0 scratch init is unsafe with a megacore
    # "parallel" batch axis, and the recompute is ~one vreg of EUP work.
    k = jax.lax.broadcasted_iota(jnp.int32, (1, count), 1).astype(jnp.float32)
    freq = jnp.exp(k * (-math.log(10000.0) / count))                 # [1, count]

    enc = noise * freq                                               # [TB, count]
    # Two lane-aligned, unmasked sub-stores (no concatenate, no temporary).
    out_ref[:, :count] = jnp.sin(enc).astype(out_ref.dtype)
    out_ref[:, count:] = jnp.cos(enc).astype(out_ref.dtype)


def _pos_enc_jnp(noise_level, dim, out_dtype):
    """Plain-jnp path (also the numerical reference). XLA fuses this into the
    consumer's first Linear, which beats a standalone pallas_call at B~8."""
    count = dim // 2
    k = jnp.arange(count, dtype=jnp.float32)
    freq = jnp.exp(k * (-math.log(10000.0) / count))
    enc = noise_level.astype(jnp.float32)[:, None] * freq[None, :]
    return jnp.concatenate([jnp.sin(enc), jnp.cos(enc)], axis=-1).astype(out_dtype)


def _round_up(x, m):
    return ((x + m - 1) // m) * m


def _pick_batch_tile(b, dim, itemsize, block_batch):
    """Largest sublane-aligned batch tile that (a) fits a conservative VMEM
    budget (double-buffered in + out, input column padded to 128 lanes) and
    (b) still leaves grid >= 2 for v7x's two TensorCores when B is large."""
    if b <= _SUBLANE:
        return b
    per_row = 2 * dim * itemsize + 2 * _LANE * 4     # out x2 bufs + padded in x2 bufs
    budget = 12 * 1024 * 1024                        # under v5e's 16 MiB scoped default
    max_rows = max(_SUBLANE, (budget // per_row) // _SUBLANE * _SUBLANE)
    tb = min(block_batch, max_rows, b)
    half = _round_up(pl.cdiv(b, 2), _SUBLANE)        # force >= 2 tiles (v7x megacore)
    tb = min(tb, half)
    return max(_SUBLANE, (tb // _SUBLANE) * _SUBLANE)


def positional_encoding(noise_level: jax.Array, dim: int, *, out_dtype=None,
                        block_batch: int = 4096, use_pallas=None) -> jax.Array:
    """noise_level: [B] float array. Returns [B, dim] sin/cos encoding.

    use_pallas=None -> auto: Pallas only for B >= 256 with lane-aligned halves,
    otherwise plain jnp so XLA fuses it into the consumer (dominant win at B~8).
    Pass out_dtype=jnp.bfloat16 to halve the store-dominated HBM writeback.
    """
    assert noise_level.ndim == 1, noise_level.shape
    assert dim % 2 == 0, f"dim must be even, got {dim}"
    b = noise_level.shape[0]
    count = dim // 2
    out_dtype = noise_level.dtype if out_dtype is None else jnp.dtype(out_dtype)

    aligned = (count % _LANE == 0)
    if use_pallas is None:
        use_pallas = (b >= _PALLAS_MIN_BATCH) and aligned
    if (not use_pallas) or (not aligned):
        # Small batch or lane-misaligned halves (would need masked vst.msk):
        # let XLA fuse it.
        return _pos_enc_jnp(noise_level, dim, out_dtype)

    itemsize = jnp.dtype(out_dtype).itemsize
    tb = _pick_batch_tile(b, dim, itemsize, block_batch)
    grid = (pl.cdiv(b, tb),)

    noise_2d = noise_level.reshape(b, 1)   # batch -> sublane axis, scalar lane

    cost = pl.CostEstimate(
        flops=b * count,
        transcendentals=b * dim + grid[0] * count,
        # input column is stored 128-lane padded; output is the real traffic
        bytes_accessed=b * _LANE * 4 + b * dim * itemsize,
    )

    return pl.pallas_call(
        _pos_enc_kernel,
        out_shape=jax.ShapeDtypeStruct((b, dim), out_dtype),
        grid=grid,
        in_specs=[pl.BlockSpec((tb, 1), lambda i: (i, 0))],
        out_specs=pl.BlockSpec((tb, dim), lambda i: (i, 0)),
        compiler_params=pltpu.CompilerParams(dimension_semantics=("parallel",)),
        cost_estimate=cost,
    )(noise_2d)


# ----------------------------------------------------------------------------
# 2) q-sample noising: x_noisy = a[b] * x + sqrt(1 - a[b]^2) * noise
# ----------------------------------------------------------------------------
def _q_sample_kernel(coef_ref, x_ref, noise_ref, out_ref):
    # coef_ref : [B, 2] f32 in SMEM -> (a, sigma) per batch element
    # x_ref    : [1, C, T_HW] VMEM tile, noise_ref likewise, out_ref likewise
    i = pl.program_id(0)
    a = coef_ref[i, 0]
    sigma = coef_ref[i, 1]
    x = x_ref[...].astype(jnp.float32)
    n = noise_ref[...].astype(jnp.float32)
    out_ref[...] = (a * x + sigma * n).astype(out_ref.dtype)


def _pick_hw_tile(c, hw, itemsize):
    budget = 8 * 1024 * 1024                 # (x, noise, out) x double-buffered
    per_lane = 6 * c * itemsize
    t = max(_LANE, (budget // per_lane) // _LANE * _LANE)
    return min(hw, t)


def q_sample(x: jax.Array, noise: jax.Array, sqrt_alpha: jax.Array) -> jax.Array:
    """x, noise: [B, C, H, W]; sqrt_alpha: [B]. Returns the noised image."""
    b, c, h, w = x.shape
    hw = h * w
    a = sqrt_alpha.astype(jnp.float32)
    sigma = jnp.sqrt(jnp.maximum(1.0 - a * a, 0.0))

    if hw % _LANE != 0:
        # TODO(synk): lane-unaligned spatial sizes - leave to XLA fusion.
        a4 = a.reshape(b, 1, 1, 1)
        s4 = sigma.reshape(b, 1, 1, 1)
        return (a4 * x + s4 * noise).astype(x.dtype)

    t_hw = _pick_hw_tile(c, hw, jnp.dtype(x.dtype).itemsize)
    grid = (b, pl.cdiv(hw, t_hw))
    coefs = jnp.stack([a, sigma], axis=-1)    # [B, 2] f32, lives in SMEM

    out = pl.pallas_call(
        _q_sample_kernel,
        out_shape=jax.ShapeDtypeStruct((b, c, hw), x.dtype),
        grid=grid,
        in_specs=[
            pl.BlockSpec(memory_space=pltpu.MemorySpace.SMEM),      # per-batch (a, sigma)
            pl.BlockSpec((1, c, t_hw), lambda i, j: (i, 0, j)),
            pl.BlockSpec((1, c, t_hw), lambda i, j: (i, 0, j)),
        ],
        out_specs=pl.BlockSpec((1, c, t_hw), lambda i, j: (i, 0, j)),
        compiler_params=pltpu.CompilerParams(
            dimension_semantics=("parallel", "parallel")),
    )(coefs, x.reshape(b, c, hw), noise.reshape(b, c, hw))
    return out.reshape(b, c, h, w)


# ----------------------------------------------------------------------------
# Self-test
# ----------------------------------------------------------------------------
if __name__ == "__main__":
    key = jax.random.PRNGKey(0)
    k1, k2, k3, k4, k5 = jax.random.split(key, 5)

    # ---- noise-level embedding fed to model_1 / model_2 ----
    dim = 256  # count = 128 -> both half-stores lane-aligned

    # Production-small batch: auto path = fused jnp (top perf-review item).
    nl_small = jax.random.uniform(k1, (8,), dtype=jnp.float32)
    ref_small = _pos_enc_jnp(nl_small, dim, jnp.float32)
    out_small = jax.block_until_ready(positional_encoding(nl_small, dim))
    assert out_small.shape == (8, dim), out_small.shape
    assert jnp.allclose(out_small, ref_small, atol=1e-5, rtol=1e-5)

    # Same batch forced through the Pallas kernel (exercise the kernel path).
    out_small_pl = jax.block_until_ready(
        positional_encoding(nl_small, dim, use_pallas=True))
    assert out_small_pl.shape == (8, dim), out_small_pl.shape
    assert jnp.allclose(out_small_pl, ref_small, atol=1e-5, rtol=1e-5), \
        float(jnp.max(jnp.abs(out_small_pl - ref_small)))

    # Large batch: Pallas path, bf16 writeback, tile chosen so grid >= 2
    # (engages both v7x TensorCores; big tiles amortize the ~0.35us/step cost).
    b_large = 2048
    nl_large = jax.random.uniform(k2, (b_large,), dtype=jnp.float32)
    out_large = jax.block_until_ready(
        positional_encoding(nl_large, dim, out_dtype=jnp.bfloat16))
    ref_large = _pos_enc_jnp(nl_large, dim, jnp.float32)
    assert out_large.shape == (b_large, dim), out_large.shape
    assert out_large.dtype == jnp.bfloat16
    assert jnp.allclose(out_large.astype(jnp.float32), ref_large,
                        atol=2e-2, rtol=2e-2), \
        float(jnp.max(jnp.abs(out_large.astype(jnp.float32) - ref_large)))

    # ---- q-sample noising from Diffusion.net ----
    b, c, img_size = 2, 3, 32
    hrHS = jax.random.normal(k3, (b, c, img_size, img_size), dtype=jnp.float32)
    noise = jax.random.normal(k4, (b, c, img_size, img_size), dtype=jnp.float32)
    sqrt_alpha = jax.random.uniform(k5, (b,), dtype=jnp.float32,
                                    minval=0.1, maxval=0.999)
    x_noisy = jax.block_until_ready(q_sample(hrHS, noise, sqrt_alpha))
    a4 = sqrt_alpha.reshape(b, 1, 1, 1)
    x_noisy_ref = a4 * hrHS + jnp.sqrt(1.0 - a4 * a4) * noise
    assert x_noisy.shape == hrHS.shape, x_noisy.shape
    assert jnp.allclose(x_noisy, x_noisy_ref, atol=1e-5, rtol=1e-5), \
        float(jnp.max(jnp.abs(x_noisy - x_noisy_ref)))

    print("KERNEL_OK")
</pallas_src>

<mosaic_0001>
module attributes {stable_mosaic.version = 11 : i64} {
  func.func @_pos_enc_kernel(%arg0: i32, %arg1: memref<8x1xf32, #tpu.memory_space<vmem>>, %arg2: memref<8x256xf32, #tpu.memory_space<vmem>>) attributes {dimension_semantics = [#tpu.dimension_semantics<parallel>], iteration_bounds = array<i64: 1>, scalar_prefetch = 0 : i64, scratch_operands = 0 : i64, tpu.core_type = #tpu.core_type<tc>, window_params = [{transform_indices = @transform_0, window_bounds = array<i64: 8, 1>}, {transform_indices = @transform_1, window_bounds = array<i64: 8, 256>}]} {
    %c0 = arith.constant 0 : index
    %c0_0 = arith.constant 0 : index
    %0 = vector.load %arg1[%c0, %c0_0] : memref<8x1xf32, #tpu.memory_space<vmem>>, vector<8x1xf32>
    %1 = tpu.iota {dimensions = array<i32: 1>} : vector<1x128xi32>
    %2 = arith.sitofp %1 : vector<1x128xi32> to vector<1x128xf32>
    %cst = arith.constant -0.0719557852 : f32
    %3 = vector.broadcast %cst : f32 to vector<1x128xf32>
    %4 = arith.mulf %2, %3 : vector<1x128xf32>
    %5 = math.exp %4 : vector<1x128xf32>
    %6 = vector.broadcast %0 : vector<8x1xf32> to vector<8x128xf32>
    %7 = vector.broadcast %5 : vector<1x128xf32> to vector<8x128xf32>
    %8 = arith.mulf %6, %7 : vector<8x128xf32>
    %9 = math.sin %8 : vector<8x128xf32>
    %c0_1 = arith.constant 0 : index
    %c0_2 = arith.constant 0 : index
    %10 = vector.load %arg2[%c0_1, %c0_2] : memref<8x256xf32, #tpu.memory_space<vmem>>, vector<8x128xf32>
    tpu.vector_store %arg2[%c0_1, %c0_2], %9 {strides = array<i32>} : memref<8x256xf32, #tpu.memory_space<vmem>>, vector<8x128xf32>,
    %11 = math.cos %8 : vector<8x128xf32>
    %c0_3 = arith.constant 0 : index
    %c128 = arith.constant 128 : index
    %12 = vector.load %arg2[%c0_3, %c128] : memref<8x256xf32, #tpu.memory_space<vmem>>, vector<8x128xf32>
    tpu.vector_store %arg2[%c0_3, %c128], %11 {strides = array<i32>} : memref<8x256xf32, #tpu.memory_space<vmem>>, vector<8x128xf32>,
    return
  }
  func.func @transform_0(%arg0: i32) -> (i32, i32) {
    %c0_i32 = arith.constant 0 : i32
    %c0_i32_0 = arith.constant 0 : i32
    return %arg0, %c0_i32 : i32, i32
  }
  func.func @transform_1(%arg0: i32) -> (i32, i32) {
    %c0_i32 = arith.constant 0 : i32
    %c0_i32_0 = arith.constant 0 : i32
    return %arg0, %c0_i32 : i32, i32
  }
}

</mosaic_0001>

<llo_original>
// kernel: tpu_custom_call.1
$region0: #{tpu_custom_call.1}
  #allocation0 [shape = 'u32[]', space=smem, size = 0x4, offset = 0x4, fixed_abs, tag = 'smem constant byte address 0x4 - core index']
  #allocation1 [shape = 'u32[144,128]{1,0:T(1,128)}', space=vmem, size = 0x12000, scoped, tag = 'internal scratch']
  %s0 = inlined_call_operand.vmem [shape: f32[8,1], index: 0, kind: input, shape index: {}]
  %s1 = inlined_call_operand.hbm [shape: f32[8,256], index: 1, kind: output, shape index: {}]
  %s2 = sld [smem:[#allocation0]]
  $region14: #{tpu_custom_call.1} parent=0
    _
  %s4 = ssub.s32 1, %s2
  %s5 = scalar_select 0, %s4, %s2
  $region1: #{tpu_custom_call.1} parent=0
    #allocation2 [shape = 'u8[8192]{0}', space=vmem, size = 0x2000, scoped, tag = 'output window, operand 0, single buffered']
    #allocation3 [shape = 's32[1]{0}', space=sflag, size = 0x4, scoped, tag = 'scoped memory for tpu_custom_call.1']
    %6 = vsyncpa [#allocation3], 0
    // Predicated region
    $region2: #{tpu_custom_call.1} parent=1 // pred_check
      _
    $region3: #{tpu_custom_call.1} parent=1 // pred_check_branch
      %8 = sbr.rel (0) target = $region5
    $region4: #{tpu_custom_call.1} parent=1 // pred_region
      _
    $region5: #{tpu_custom_call.1} parent=1 // pred_fallthru
      _
    %v9 = vld [vmem:[%s0] sm:$0xff]
    %v10 = vlaneseq
    %v11 = vand.u32 %v10, 127
    %v12 = vcvt.s32.f32 %v11
    %v13 = vmul.f32 %v12, -0.071955785
    %v14 = vmul.f32 %v13, 1.442695
    %v15 = vpow.pop %v14
    %17 = vset.pattern.permute.xlu0 0
    %18 = vperm.xlu0 %17, %v9
    %v19 = vpop.permute.xlu0 %18
    %v21 = vmul.f32 %v19, %v15
    %v22 = vand.u32 2147483647, %v21
    %vm23 = vcmp.le.f32.partialorder %v22, 0.7853982
    %vm24 = vcmp.lt.s32.totalorder %v21, 0
    %v25 = vand.u32 %v21, 2139095040
    %v26 = vshrl.u32 %v25, 23
    %v27 = vsub.s32 %v26, 127
    %v28 = vand.u32 2147483647, %v21
    %v29 = vand.u32 %v28, 8388607
    %v30 = vor.u32 %v29, 8388608
    %v31 = vsub.s32 0, %v30
    %v32 = vadd.s32 %v27, 1
    %vm33 = vcmp.gt.s32.totalorder %v32, 0
    %v34 = vsel %vm33, %v32, 0
    %v35 = vshrl.u32 %v34, 5
    %v36 = vand.u32 %v34, 31
    %v37 = vsub.s32 32, %v36
    %v38 = vshrl.u32 683565275, %v37
    %v39 = vshll.u32 683565275, %v36
    %v40 = vshrl.u32 2475754826, %v37
    %v41 = vor.u32 %v39, %v40
    %v42 = vshll.u32 2475754826, %v36
    %v43 = vshrl.u32 2131351028, %v37
    %v44 = vor.u32 %v42, %v43
    %v45 = vshll.u32 2131351028, %v36
    %v46 = vshrl.u32 2102212464, %v37
    %v47 = vor.u32 %v45, %v46
    %v48 = vshll.u32 2102212464, %v36
    %v49 = vshrl.u32 920167782, %v37
    %v50 = vor.u32 %v48, %v49
    %v51 = vshll.u32 920167782, %v36
    %v52 = vshrl.u32 1326507024, %v37
    %v53 = vor.u32 %v51, %v52
    %vm54 = vcmp.lt.s32.totalorder %v35, 1
    %vm55 = vcmp.lt.s32.totalorder %v35, 2
    %vm56 = vcmp.lt.s32.totalorder %v35, 3
    %vm57 = vcmp.lt.s32.totalorder %v35, 4
    %v58 = vsel %vm54, %v38, %v41
    %v59 = vsel %vm57, %v47, 2102212464
    %v60 = vsel %vm56, %v44, %v59
    %v61 = vsel %vm55, %v58, %v60
    %v62 = vsel %vm54, %v41, %v44
    %v63 = vsel %vm57, %v50, 920167782
    %v64 = vsel %vm56, %v47, %v63
    %v65 = vsel %vm55, %v62, %v64
    %v66 = vsel %vm54, %v44, %v47
    %v67 = vsel %vm57, %v53, 1326507024
    %v68 = vsel %vm56, %v50, %v67
    %v69 = vsel %vm55, %v66, %v68
    %v70 = vshll.u32 %v30, 8
    %v71 = vmul.u32.u64.compose %v70, %v69
    %v72 = vextract.low.u32 %v71
    %v73 = vextract.high.u32 %v71
    %v74 = vmul.u32.u64.compose %v70, %v65
    %v75 = vextract.low.u32 %v74
    %v76 = vextract.high.u32 %v74
    %v77 = vmul.u32 %v70, %v61
    %v78 = vadd.s32 %v73, %v75
    %vm79 = vc.u32 %v73, %v75
    %v80 = vadd.s32 %v76, 1
    %v81 = vsel %vm79, %v80, %v76
    %v82 = vadd.s32 %v77, %v81
    %v83 = vadd.s32 %v82, 536870912
    %v84 = vshrl.u32 %v83, 30
    %v85 = vshll.u32 %v84, 30
    %v86 = vsub.s32 %v82, %v85
    %vm87 = vcmp.lt.s32.totalorder %v86, 0
    %v88 = vsub.s32 0, %v86
    %v89 = vsel %vm87, %v88, %v86
    %v90 = vclz %v89
    %v91 = vsub.s32 %v90, 2
    %vm92 = vcmp.gt.s32.totalorder 0, %v91
    %v93 = vsel %vm92, 0, %v91
    %v94 = vsub.s32 32, %v93
    %v95 = vshll.u32 %v86, %v93
    %v96 = vshrl.u32 %v78, %v94
    %v97 = vor.u32 %v95, %v96
    %v98 = vsub.s32 4294967266, %v93
    %v99 = vadd.s32 %v98, 127
    %v100 = vshll.u32 %v99, 23
    %v101 = vor.u32 4788187, %v100
    %v102 = vand.u32 2147483647, %v101
    %v104 = vcvt.s32.f32 %v97
    %v105 = vmul.f32 %v104, %v102
    %v106 = vxor.u32 %v105, 2147483648
    %v107 = vsel %vm24, %v106, %v105
    %v108 = vsub.s32 4, %v84
    %v109 = vsel %vm24, %v108, %v84
    %v110 = vsel %vm23, %v21, %v107
    %v111 = vsel %vm23, 0, %v109
    %v112 = vcosq.f32.pop %v110
    %v113 = vsinq.f32.pop %v110
    %vm114 = vweird.f32 %v21
    %v115 = vadd.s32 %v111, 3
    %v116 = vand.u32 %v115, 3
    %vm117 = vcmp.lt.s32.totalorder %v116, 2
    %vm118 = vcmp.eq.s32.totalorder %v116, 0
    %v119 = vxor.u32 %v113, 2147483648
    %v120 = vsel %vm118, %v112, %v119
    %vm121 = vcmp.eq.s32.totalorder %v116, 2
    %v122 = vxor.u32 %v112, 2147483648
    %v123 = vsel %vm121, %v122, %v113
    %v124 = vsel %vm117, %v120, %v123
    %v125 = vsel %vm114, nan, %v124
    %126 = vst [vmem:[#allocation2] sm:$0xff] %v125
    %v127 = vand.u32 2147483647, %v21
    %vm128 = vcmp.le.f32.partialorder %v127, 0.7853982
    %vm129 = vcmp.lt.s32.totalorder %v21, 0
    %v130 = vand.u32 %v21, 2139095040
    %v131 = vshrl.u32 %v130, 23
    %v132 = vsub.s32 %v131, 127
    %v133 = vand.u32 2147483647, %v21
    %v134 = vand.u32 %v133, 8388607
    %v135 = vor.u32 %v134, 8388608
    %v136 = vsub.s32 0, %v135
    %v137 = vadd.s32 %v132, 1
    %vm138 = vcmp.gt.s32.totalorder %v137, 0
    %v139 = vsel %vm138, %v137, 0
    %v140 = vshrl.u32 %v139, 5
    %v141 = vand.u32 %v139, 31
    %v142 = vsub.s32 32, %v141
    %v143 = vshrl.u32 683565275, %v142
    %v144 = vshll.u32 683565275, %v141
    %v145 = vshrl.u32 2475754826, %v142
    %v146 = vor.u32 %v144, %v145
    %v147 = vshll.u32 2475754826, %v141
    %v148 = vshrl.u32 2131351028, %v142
    %v149 = vor.u32 %v147, %v148
    %v150 = vshll.u32 2131351028, %v141
    %v151 = vshrl.u32 2102212464, %v142
    %v152 = vor.u32 %v150, %v151
    %v153 = vshll.u32 2102212464, %v141
    %v154 = vshrl.u32 920167782, %v142
    %v155 = vor.u32 %v153, %v154
    %v156 = vshll.u32 920167782, %v141
    %v157 = vshrl.u32 1326507024, %v142
    %v158 = vor.u32 %v156, %v157
    %vm159 = vcmp.lt.s32.totalorder %v140, 1
    %vm160 = vcmp.lt.s32.totalorder %v140, 2
    %vm161 = vcmp.lt.s32.totalorder %v140, 3
    %vm162 = vcmp.lt.s32.totalorder %v140, 4
    %v163 = vsel %vm159, %v143, %v146
    %v164 = vsel %vm162, %v152, 2102212464
    %v165 = vsel %vm161, %v149, %v164
    %v166 = vsel %vm160, %v163, %v165
    %v167 = vsel %vm159, %v146, %v149
    %v168 = vsel %vm162, %v155, 920167782
    %v169 = vsel %vm161, %v152, %v168
    %v170 = vsel %vm160, %v167, %v169
    %v171 = vsel %vm159, %v149, %v152
    %v172 = vsel %vm162, %v158, 1326507024
    %v173 = vsel %vm161, %v155, %v172
    %v174 = vsel %vm160, %v171, %v173
    %v175 = vshll.u32 %v135, 8
    %v176 = vmul.u32.u64.compose %v175, %v174
    %v177 = vextract.low.u32 %v176
    %v178 = vextract.high.u32 %v176
    %v179 = vmul.u32.u64.compose %v175, %v170
    %v180 = vextract.low.u32 %v179
    %v181 = vextract.high.u32 %v179
    %v182 = vmul.u32 %v175, %v166
    %v183 = vadd.s32 %v178, %v180
    %vm184 = vc.u32 %v178, %v180
    %v185 = vadd.s32 %v181, 1
    %v186 = vsel %vm184, %v185, %v181
    %v187 = vadd.s32 %v182, %v186
    %v188 = vadd.s32 %v187, 536870912
    %v189 = vshrl.u32 %v188, 30
    %v190 = vshll.u32 %v189, 30
    %v191 = vsub.s32 %v187, %v190
    %vm192 = vcmp.lt.s32.totalorder %v191, 0
    %v193 = vsub.s32 0, %v191
    %v194 = vsel %vm192, %v193, %v191
    %v195 = vclz %v194
    %v196 = vsub.s32 %v195, 2
    %vm197 = vcmp.gt.s32.totalorder 0, %v196
    %v198 = vsel %vm197, 0, %v196
    %v199 = vsub.s32 32, %v198
    %v200 = vshll.u32 %v191, %v198
    %v201 = vshrl.u32 %v183, %v199
    %v202 = vor.u32 %v200, %v201
    %v203 = vsub.s32 4294967266, %v198
    %v204 = vadd.s32 %v203, 127
    %v205 = vshll.u32 %v204, 23
    %v206 = vor.u32 4788187, %v205
    %v207 = vand.u32 2147483647, %v206
    %v209 = vcvt.s32.f32 %v202
    %v210 = vmul.f32 %v209, %v207
    %v211 = vxor.u32 %v210, 2147483648
    %v212 = vsel %vm129, %v211, %v210
    %v213 = vsub.s32 4, %v189
    %v214 = vsel %vm129, %v213, %v189
    %v215 = vsel %vm128, %v21, %v212
    %v216 = vsel %vm128, 0, %v214
    %v217 = vcosq.f32.pop %v215
    %v218 = vsinq.f32.pop %v215
    %vm219 = vweird.f32 %v21
    %v220 = vand.u32 %v216, 3
    %vm221 = vcmp.lt.s32.totalorder %v220, 2
    %vm222 = vcmp.eq.s32.totalorder %v220, 0
    %v223 = vxor.u32 %v218, 2147483648
    %v224 = vsel %vm222, %v217, %v223
    %vm225 = vcmp.eq.s32.totalorder %v220, 2
    %v226 = vxor.u32 %v217, 2147483648
    %v227 = vsel %vm225, %v226, %v218
    %v228 = vsel %vm221, %v224, %v227
    %v229 = vsel %vm219, nan, %v228
    %230 = vst [vmem:[#allocation2 + $0x8] sm:$0xff] %v229
    // Predicated region
    $region6: #{tpu_custom_call.1} parent=1 // pred_check
      _
    $region7: #{tpu_custom_call.1} parent=1 // pred_check_branch
      %232 = sbr.rel (0) target = $region9
    $region8: #{tpu_custom_call.1} parent=1 // pred_region
      %s234 = ssub.s32 256, 256
      %235 = vsyncadd [#allocation3], %s234
      %s237 = sshll.u32 [#allocation2], 4
      %s238 = int_to_ptr.vmem [resolvable:$true] %s237
      %240 = dma.vmem_to_hbm [thread:$0]  %s238, 256, %s1, [#allocation3]
    $region9: #{tpu_custom_call.1} parent=1 // pred_fallthru
      _
    // Predicated region
    $region10: #{tpu_custom_call.1} parent=1 // pred_check
      _
    $region11: #{tpu_custom_call.1} parent=1 // pred_check_branch
      %242 = sbr.rel (0) target = $region13
    $region12: #{tpu_custom_call.1} parent=1 // pred_region
      %243 = dma.done [#allocation3], 256
    $region13: #{tpu_custom_call.1} parent=1 // pred_fallthru
      _
    %244 = vsyncpa [#allocation3], 1

</llo_original>
